<compile_context>
chip_gen: v6e
topology: v6e:2x2x1
jax: 0.10.0
libtpu: 0.0.40
codegen_flags: <defaults>
</compile_context>

<pallas_src>
import functools
import math

import jax
import jax.numpy as jnp
from jax.experimental import pallas as pl
from jax.experimental.pallas import tpu as pltpu


# ----------------------------------------------------------------------------
# helpers
# ----------------------------------------------------------------------------
def _round_up(n: int, m: int) -> int:
    return ((n + m - 1) // m) * m


def _round_up8(n: int) -> int:
    return _round_up(n, 8)


def _round_down8(n: int) -> int:
    return max(8, (n // 8) * 8)


def _tpu_vmem_and_cores():
    """Best-effort per-generation query: (VMEM capacity bytes, TCs per chip)."""
    kind = ""
    try:
        kind = jax.devices()[0].device_kind.lower()
    except Exception:
        pass
    vmem_cap = None
    try:
        vmem_cap = int(pltpu.get_tpu_info().vmem_capacity_bytes)
    except Exception:
        vmem_cap = None
    if vmem_cap is None or vmem_cap <= 0:
        vmem_cap = (64 << 20) if "v7" in kind else (128 << 20)
    n_cores = 2 if any(t in kind for t in ("v7", "v5p", "v4")) else 1
    return vmem_cap, n_cores


# ----------------------------------------------------------------------------
# kernel
# ----------------------------------------------------------------------------
def _make_mlp_kernel(n_layers: int, activation: str, mxu_dtype):
    """Kernel closure over static layer count / activation / MXU feed dtype."""

    def kernel(x_ref, *refs):
        # refs layout: w0, b0, w1, b1, ..., w_{L-1}, b_{L-1}, o_ref
        o_ref = refs[-1]
        h = x_ref[...]
        if mxu_dtype is not None and h.dtype != mxu_dtype:
            h = h.astype(mxu_dtype)
        for i in range(n_layers):
            w = refs[2 * i][...]                           # (in, out)
            b = refs[2 * i + 1][...].astype(jnp.float32)   # (1, out)
            h = jnp.dot(h, w, preferred_element_type=jnp.float32) + b
            if i < n_layers - 1:
                if activation == "leaky_relu":
                    h = jnp.where(h > 0, h, 0.1 * h)       # nn.LeakyReLU(0.1)
                else:
                    h = jnp.tanh(h)                        # nn.Tanh (EUP)
                if mxu_dtype is not None:
                    h = h.astype(mxu_dtype)
        o_ref[...] = h.astype(o_ref.dtype)

    return kernel


# ----------------------------------------------------------------------------
# wrapper
# ----------------------------------------------------------------------------
def nonlinear_map_forward(x, weights, biases, *, activation="leaky_relu",
                          tm=None, mxu_bf16=False,
                          target_block_bytes=1 << 20):
    """Pallas implementation of NonLinearMap.forward.

    x:        (..., emb_dim)
    weights:  list of (in_dim, out_dim) arrays   (len == n_layers)
              (== transpose of torch.nn.Linear's (out, in) weight)
    biases:   list of (out_dim,) arrays
    tm:       optional packed-row tile override (multiple of 8); default auto.
    """
    n_layers = len(weights)
    emb_dim = x.shape[-1]
    assert emb_dim == weights[0].shape[0]
    assert weights[-1].shape[1] == emb_dim
    assert activation in ("leaky_relu", "tanh")

    lead_shape = x.shape[:-1]
    rows = int(math.prod(lead_shape)) if lead_shape else 1
    x2 = x.reshape(rows, emb_dim)

    vmem_cap, n_cores = _tpu_vmem_and_cores()
    vmem_budget = int(vmem_cap * 3 // 4)          # headroom under physical cap

    # --- lane-dense packing (wrapper-side, kernel unchanged) -----------------
    pack = 1
    if emb_dim < 128 and 128 % emb_dim == 0:
        pack = 128 // emb_dim
        # block-diagonal weights grow pack^2 in element count; fall back if
        # that would eat too much VMEM (not the case for typical hidden sizes)
        packed_w_bytes = sum(
            pack * w.shape[0] * pack * w.shape[1] * w.dtype.itemsize
            for w in weights)
        if 2 * packed_w_bytes > vmem_budget // 2:
            pack = 1

    pad_rows = 0
    if pack > 1:
        pad_rows = (-rows) % pack
        if pad_rows:
            x2 = jnp.concatenate(
                [x2, jnp.zeros((pad_rows, emb_dim), x2.dtype)], axis=0)
        rows_k = (rows + pad_rows) // pack
        # row-major reshape == pack consecutive rows along the 128 lanes
        x2 = x2.reshape(rows_k, pack * emb_dim)
        pk_weights = [jnp.kron(jnp.eye(pack, dtype=w.dtype), w) for w in weights]
        pk_biases = [jnp.tile(b, pack) for b in biases]
    else:
        rows_k = rows
        pk_weights = list(weights)
        pk_biases = list(biases)

    if mxu_bf16:
        # bf16-native MXU feed (v6e/v7x): halves weight DMA / MXU passes, but
        # rounds operands to bf16 (f32 accumulation kept). Precision trade-off.
        pk_weights = [w.astype(jnp.bfloat16) for w in pk_weights]

    d_in = x2.shape[-1]
    d_out = pk_weights[-1].shape[1]
    pk_biases2d = [b.reshape(1, -1) for b in pk_biases]

    # --- row-tile selection (lane-padding-aware VMEM estimate) ---------------
    itemsize = x.dtype.itemsize
    widest = max(max(w.shape[1] for w in pk_weights), d_in)
    in_row_bytes = _round_up(d_in, 128) * itemsize       # physical (lane-padded)
    out_row_bytes = _round_up(d_out, 128) * itemsize
    h_row_bytes = _round_up(widest, 128) * 4             # live f32 intermediate

    param_bytes = sum(2 * w.size * w.dtype.itemsize for w in pk_weights)
    param_bytes += sum(2 * 8 * _round_up(b.size, 128) * b.dtype.itemsize
                       for b in pk_biases)

    def _io_bytes(t):
        # double-buffered input + output blocks + widest live f32 intermediate
        return 2 * t * in_row_bytes + 2 * t * out_row_bytes + t * h_row_bytes

    if tm is None:
        tm_eff = _round_down8(max(8, target_block_bytes // max(in_row_bytes, 1)))
    else:
        tm_eff = max(8, _round_up8(int(tm)))

    if n_cores > 1 and rows_k > 16 * n_cores:
        # multi-TC chips only: keep >= 2 balanced steps per core so a ragged
        # tail doesn't leave one core idle; single-TC chips skip this (a grid
        # there is a serial loop -> extra steps are pure overhead).
        tm_eff = min(tm_eff, _round_up8(-(-rows_k // (2 * n_cores))))

    while tm_eff > 8 and param_bytes + _io_bytes(tm_eff) > vmem_budget:
        tm_eff = _round_down8(tm_eff // 2)

    if tm_eff >= rows_k:
        tm_eff = rows_k     # full-extent first dim: exempt from the /8 rule

    grid = (pl.cdiv(rows_k, tm_eff),)

    # --- specs ----------------------------------------------------------------
    in_specs = [pl.BlockSpec((tm_eff, d_in), lambda i: (i, 0))]
    flat_params = []
    for w, b in zip(pk_weights, pk_biases2d):
        in_specs.append(pl.BlockSpec(w.shape, lambda i: (0, 0)))   # resident
        in_specs.append(pl.BlockSpec(b.shape, lambda i: (0, 0)))   # resident
        flat_params.append(w)
        flat_params.append(b)
    out_spec = pl.BlockSpec((tm_eff, d_out), lambda i: (i, 0))

    compiler_kwargs = dict(dimension_semantics=("parallel",))
    est = param_bytes + _io_bytes(tm_eff)
    if est > (12 << 20):
        # only raise the scoped-VMEM limit when the footprint needs it; cap
        # below this generation's physical capacity.
        limit = max(2 * est, est + (4 << 20))
        compiler_kwargs["vmem_limit_bytes"] = int(min(limit, int(vmem_cap * 0.9)))

    # advisory cost estimate (original, unpacked arithmetic)
    flops = 2 * rows * sum(int(w.shape[0]) * int(w.shape[1]) for w in weights)
    transcendentals = (rows * sum(int(w.shape[1]) for w in weights[:-1])
                       if activation == "tanh" else 0)
    bytes_accessed = (rows * emb_dim * itemsize * 2
                      + sum(int(w.size) * w.dtype.itemsize for w in pk_weights)
                      + sum(int(b.size) * b.dtype.itemsize for b in pk_biases))
    cost = pl.CostEstimate(flops=int(flops),
                           transcendentals=int(transcendentals),
                           bytes_accessed=int(bytes_accessed))

    kernel = _make_mlp_kernel(n_layers, activation,
                              jnp.bfloat16 if mxu_bf16 else None)

    out = pl.pallas_call(
        kernel,
        out_shape=jax.ShapeDtypeStruct((rows_k, d_out), x.dtype),
        grid_spec=pltpu.PrefetchScalarGridSpec(
            num_scalar_prefetch=0,
            grid=grid,
            in_specs=in_specs,
            out_specs=out_spec,
        ),
        compiler_params=pltpu.CompilerParams(**compiler_kwargs),
        cost_estimate=cost,
    )(x2, *flat_params)

    if pack > 1:
        out = out.reshape(rows_k * pack, emb_dim)
        if pad_rows:
            out = out[:rows]
    return out.reshape(*lead_shape, emb_dim)


# ----------------------------------------------------------------------------
# params + reference
# ----------------------------------------------------------------------------
def init_params(emb_dim, hidden_size, n_layers, key):
    """Deterministic init matching the nn.Linear shapes of the module."""
    weights, biases = [], []
    for i in range(n_layers):
        in_dim = emb_dim if i == 0 else hidden_size
        out_dim = emb_dim if i == n_layers - 1 else hidden_size
        key, kw, kb = jax.random.split(key, 3)
        bound = 1.0 / jnp.sqrt(in_dim)
        # stored as (in, out) == transpose of torch's (out, in) weight
        w = jax.random.uniform(kw, (in_dim, out_dim), jnp.float32, -bound, bound)
        b = jax.random.uniform(kb, (out_dim,), jnp.float32, -bound, bound)
        weights.append(w)
        biases.append(b)
    return weights, biases


def _reference(x, weights, biases, activation):
    h = x.reshape(-1, x.shape[-1]).astype(jnp.float32)
    for i, (w, b) in enumerate(zip(weights, biases)):
        h = h @ w.astype(jnp.float32) + b.astype(jnp.float32)
        if i < len(weights) - 1:
            if activation == "leaky_relu":
                h = jnp.where(h > 0, h, 0.1 * h)
            else:
                h = jnp.tanh(h)
    return h.reshape(x.shape).astype(x.dtype)


if __name__ == "__main__":
    # Config consistent with the module's forward:
    #   args.emb_dim=32, args.hidden_size=64, args.n_layers=3
    emb_dim, hidden_size, n_layers = 32, 64, 3

    key = jax.random.PRNGKey(0)
    kx1, kx2, kx3, kp = jax.random.split(key, 4)
    weights, biases = init_params(emb_dim, hidden_size, n_layers, kp)

    ok = True

    # 1) Small case (batch=2, seq=8), leaky_relu; rows divisible by the pack.
    x1 = jax.random.normal(kx1, (2, 8, emb_dim), jnp.float32)
    fwd_lr = functools.partial(nonlinear_map_forward, activation="leaky_relu")
    out1 = jax.block_until_ready(fwd_lr(x1, weights, biases))
    ref1 = _reference(x1, weights, biases, "leaky_relu")
    ok &= bool(out1.shape == x1.shape)
    ok &= bool(jnp.allclose(out1, ref1, atol=1e-4, rtol=1e-4))

    # 2) Ragged row count (rows % pack != 0), tanh.
    x2 = jax.random.normal(kx2, (3, 7, emb_dim), jnp.float32)
    fwd_th = functools.partial(nonlinear_map_forward, activation="tanh")
    out2 = jax.block_until_ready(fwd_th(x2, weights, biases))
    ref2 = _reference(x2, weights, biases, "tanh")
    ok &= bool(out2.shape == x2.shape)
    ok &= bool(jnp.allclose(out2, ref2, atol=1e-4, rtol=1e-4))

    # 3) Larger row count exercising the packed, lane-dense path.
    x3 = jax.random.normal(kx3, (4, 300, emb_dim), jnp.float32)
    out3 = jax.block_until_ready(fwd_lr(x3, weights, biases))
    ref3 = _reference(x3, weights, biases, "leaky_relu")
    ok &= bool(out3.shape == x3.shape)
    ok &= bool(jnp.allclose(out3, ref3, atol=1e-4, rtol=1e-4))

    assert ok, "Pallas NonLinearMap output mismatch vs reference"
    print("KERNEL_OK")
</pallas_src>

<mosaic_0001>
module attributes {stable_mosaic.version = 11 : i64} {
  func.func @kernel(%arg0: i32, %arg1: memref<4x128xf32, #tpu.memory_space<vmem>>, %arg2: memref<128x256xf32, #tpu.memory_space<vmem>>, %arg3: memref<1x256xf32, #tpu.memory_space<vmem>>, %arg4: memref<256x256xf32, #tpu.memory_space<vmem>>, %arg5: memref<1x256xf32, #tpu.memory_space<vmem>>, %arg6: memref<256x128xf32, #tpu.memory_space<vmem>>, %arg7: memref<1x128xf32, #tpu.memory_space<vmem>>, %arg8: memref<4x128xf32, #tpu.memory_space<vmem>>) attributes {dimension_semantics = [#tpu.dimension_semantics<parallel>], iteration_bounds = array<i64: 1>, scalar_prefetch = 0 : i64, scratch_operands = 0 : i64, tpu.core_type = #tpu.core_type<tc>, window_params = [{transform_indices = @transform_0, window_bounds = array<i64: 4, 128>}, {pipeline_mode = #tpu.pipeline_mode<synchronous>, transform_indices = @transform_1, window_bounds = array<i64: 128, 256>}, {pipeline_mode = #tpu.pipeline_mode<synchronous>, transform_indices = @transform_2, window_bounds = array<i64: 1, 256>}, {pipeline_mode = #tpu.pipeline_mode<synchronous>, transform_indices = @transform_3, window_bounds = array<i64: 256, 256>}, {pipeline_mode = #tpu.pipeline_mode<synchronous>, transform_indices = @transform_4, window_bounds = array<i64: 1, 256>}, {pipeline_mode = #tpu.pipeline_mode<synchronous>, transform_indices = @transform_5, window_bounds = array<i64: 256, 128>}, {pipeline_mode = #tpu.pipeline_mode<synchronous>, transform_indices = @transform_6, window_bounds = array<i64: 1, 128>}, {transform_indices = @transform_7, window_bounds = array<i64: 4, 128>}]} {
    %c0 = arith.constant 0 : index
    %c0_0 = arith.constant 0 : index
    %0 = vector.load %arg1[%c0, %c0_0] : memref<4x128xf32, #tpu.memory_space<vmem>>, vector<4x128xf32>
    %c0_1 = arith.constant 0 : index
    %c0_2 = arith.constant 0 : index
    %1 = vector.load %arg2[%c0_1, %c0_2] : memref<128x256xf32, #tpu.memory_space<vmem>>, vector<128x256xf32>
    %c0_3 = arith.constant 0 : index
    %c0_4 = arith.constant 0 : index
    %2 = vector.load %arg3[%c0_3, %c0_4] : memref<1x256xf32, #tpu.memory_space<vmem>>, vector<1x256xf32>
    %cst = arith.constant dense<0.000000e+00> : vector<4x256xf32>
    %3 = tpu.matmul %0, %1, %cst {dimension_numbers = #tpu.dot_dimension_numbers<[1], [0], [0], [1], [0, 0, 1, 1], [], []>} : vector<4x128xf32>, vector<128x256xf32>, vector<4x256xf32> -> vector<4x256xf32>
    %4 = vector.broadcast %2 : vector<1x256xf32> to vector<4x256xf32>
    %5 = arith.addf %3, %4 : vector<4x256xf32>
    %cst_5 = arith.constant 0.000000e+00 : f32
    %6 = vector.broadcast %cst_5 : f32 to vector<4x256xf32>
    %7 = arith.cmpf ogt, %5, %6 : vector<4x256xf32>
    %cst_6 = arith.constant 1.000000e-01 : f32
    %8 = vector.broadcast %cst_6 : f32 to vector<4x256xf32>
    %9 = arith.mulf %8, %5 : vector<4x256xf32>
    %10 = arith.select %7, %5, %9 : vector<4x256xi1>, vector<4x256xf32>
    %c0_7 = arith.constant 0 : index
    %c0_8 = arith.constant 0 : index
    %11 = vector.load %arg4[%c0_7, %c0_8] : memref<256x256xf32, #tpu.memory_space<vmem>>, vector<256x256xf32>
    %c0_9 = arith.constant 0 : index
    %c0_10 = arith.constant 0 : index
    %12 = vector.load %arg5[%c0_9, %c0_10] : memref<1x256xf32, #tpu.memory_space<vmem>>, vector<1x256xf32>
    %cst_11 = arith.constant dense<0.000000e+00> : vector<4x256xf32>
    %13 = tpu.matmul %10, %11, %cst_11 {dimension_numbers = #tpu.dot_dimension_numbers<[1], [0], [0], [1], [0, 0, 1, 1], [], []>} : vector<4x256xf32>, vector<256x256xf32>, vector<4x256xf32> -> vector<4x256xf32>
    %14 = vector.broadcast %12 : vector<1x256xf32> to vector<4x256xf32>
    %15 = arith.addf %13, %14 : vector<4x256xf32>
    %cst_12 = arith.constant 0.000000e+00 : f32
    %16 = vector.broadcast %cst_12 : f32 to vector<4x256xf32>
    %17 = arith.cmpf ogt, %15, %16 : vector<4x256xf32>
    %cst_13 = arith.constant 1.000000e-01 : f32
    %18 = vector.broadcast %cst_13 : f32 to vector<4x256xf32>
    %19 = arith.mulf %18, %15 : vector<4x256xf32>
    %20 = arith.select %17, %15, %19 : vector<4x256xi1>, vector<4x256xf32>
    %c0_14 = arith.constant 0 : index
    %c0_15 = arith.constant 0 : index
    %21 = vector.load %arg6[%c0_14, %c0_15] : memref<256x128xf32, #tpu.memory_space<vmem>>, vector<256x128xf32>
    %c0_16 = arith.constant 0 : index
    %c0_17 = arith.constant 0 : index
    %22 = vector.load %arg7[%c0_16, %c0_17] : memref<1x128xf32, #tpu.memory_space<vmem>>, vector<1x128xf32>
    %cst_18 = arith.constant dense<0.000000e+00> : vector<4x128xf32>
    %23 = tpu.matmul %20, %21, %cst_18 {dimension_numbers = #tpu.dot_dimension_numbers<[1], [0], [0], [1], [0, 0, 1, 1], [], []>} : vector<4x256xf32>, vector<256x128xf32>, vector<4x128xf32> -> vector<4x128xf32>
    %24 = vector.broadcast %22 : vector<1x128xf32> to vector<4x128xf32>
    %25 = arith.addf %23, %24 : vector<4x128xf32>
    %c0_19 = arith.constant 0 : index
    %c0_20 = arith.constant 0 : index
    %26 = vector.load %arg8[%c0_19, %c0_20] : memref<4x128xf32, #tpu.memory_space<vmem>>, vector<4x128xf32>
    tpu.vector_store %arg8[%c0_19, %c0_20], %25 {strides = array<i32>} : memref<4x128xf32, #tpu.memory_space<vmem>>, vector<4x128xf32>,
    return
  }
  func.func @transform_0(%arg0: i32) -> (i32, i32) {
    %c0_i32 = arith.constant 0 : i32
    %c0_i32_0 = arith.constant 0 : i32
    return %arg0, %c0_i32 : i32, i32
  }
  func.func @transform_1(%arg0: i32) -> (i32, i32) {
    %c0_i32 = arith.constant 0 : i32
    %c0_i32_0 = arith.constant 0 : i32
    %c0_i32_1 = arith.constant 0 : i32
    return %c0_i32, %c0_i32_0 : i32, i32
  }
  func.func @transform_2(%arg0: i32) -> (i32, i32) {
    %c0_i32 = arith.constant 0 : i32
    %c0_i32_0 = arith.constant 0 : i32
    %c0_i32_1 = arith.constant 0 : i32
    return %c0_i32, %c0_i32_0 : i32, i32
  }
  func.func @transform_3(%arg0: i32) -> (i32, i32) {
    %c0_i32 = arith.constant 0 : i32
    %c0_i32_0 = arith.constant 0 : i32
    %c0_i32_1 = arith.constant 0 : i32
    return %c0_i32, %c0_i32_0 : i32, i32
  }
  func.func @transform_4(%arg0: i32) -> (i32, i32) {
    %c0_i32 = arith.constant 0 : i32
    %c0_i32_0 = arith.constant 0 : i32
    %c0_i32_1 = arith.constant 0 : i32
    return %c0_i32, %c0_i32_0 : i32, i32
  }
  func.func @transform_5(%arg0: i32) -> (i32, i32) {
    %c0_i32 = arith.constant 0 : i32
    %c0_i32_0 = arith.constant 0 : i32
    %c0_i32_1 = arith.constant 0 : i32
    return %c0_i32, %c0_i32_0 : i32, i32
  }
  func.func @transform_6(%arg0: i32) -> (i32, i32) {
    %c0_i32 = arith.constant 0 : i32
    %c0_i32_0 = arith.constant 0 : i32
    %c0_i32_1 = arith.constant 0 : i32
    return %c0_i32, %c0_i32_0 : i32, i32
  }
  func.func @transform_7(%arg0: i32) -> (i32, i32) {
    %c0_i32 = arith.constant 0 : i32
    %c0_i32_0 = arith.constant 0 : i32
    return %arg0, %c0_i32 : i32, i32
  }
}

</mosaic_0001>

<llo_original>
// kernel: tpu_custom_call.1
$region0: #{tpu_custom_call.1}
  #allocation0 [shape = 'u32[]', space=smem, size = 0x4, offset = 0x4, fixed_abs, tag = 'smem constant byte address 0x4 - core index']
  #allocation1 [shape = 'u32[144,128]{1,0:T(1,128)}', space=vmem, size = 0x12000, scoped, tag = 'internal scratch']
  %s0 = inlined_call_operand.hbm [shape: f32[4,128], index: 0, kind: input, shape index: {}]
  %s1 = inlined_call_operand.hbm [shape: f32[128,256], index: 1, kind: input, shape index: {}]
  %s2 = inlined_call_operand.vmem [shape: f32[1,256], index: 2, kind: input, shape index: {}]
  %s3 = inlined_call_operand.hbm [shape: f32[256,256], index: 3, kind: input, shape index: {}]
  %s4 = inlined_call_operand.vmem [shape: f32[1,256], index: 4, kind: input, shape index: {}]
  %s5 = inlined_call_operand.hbm [shape: f32[256,128], index: 5, kind: input, shape index: {}]
  %s6 = inlined_call_operand.vmem [shape: f32[1,128], index: 6, kind: input, shape index: {}]
  %s7 = inlined_call_operand.hbm [shape: f32[4,128], index: 7, kind: output, shape index: {}]
  %s8 = sld [smem:[#allocation0]]
  $region54: #{tpu_custom_call.1} parent=0
    _
  %s10 = ssub.s32 1, %s8
  %s11 = scalar_select 0, %s10, %s8
  $region1: #{tpu_custom_call.1} parent=0
    #allocation2 [shape = 'u8[2048]{0}', space=vmem, size = 0x800, scoped, tag = 'input window, operand 0, single buffered']
    #allocation3 [shape = 's32[1]{0}', space=sflag, size = 0x4, scoped, tag = 'scoped memory for tpu_custom_call.1']
    #allocation4 [shape = 's32[1]{0}', space=sflag, size = 0x4, scoped, tag = 'scoped memory for tpu_custom_call.1']
    #allocation5 [shape = 'u8[131072]{0}', space=vmem, size = 0x20000, scoped, tag = 'input window, operand 1, single buffered']
    #allocation6 [shape = 's32[1]{0}', space=sflag, size = 0x4, scoped, tag = 'scoped memory for tpu_custom_call.1']
    #allocation7 [shape = 'u8[262144]{0}', space=vmem, size = 0x40000, scoped, tag = 'input window, operand 3, single buffered']
    #allocation8 [shape = 'u8[131072]{0}', space=vmem, size = 0x20000, scoped, tag = 'input window, operand 5, single buffered']
    #allocation9 [shape = 's32[1]{0}', space=sflag, size = 0x4, scoped, tag = 'scoped memory for tpu_custom_call.1']
    #allocation10 [shape = 'u8[2048]{0}', space=vmem, size = 0x800, scoped, tag = 'output window, operand 0, single buffered']
    %12 = vsyncpa [#allocation3], 0
    %13 = vsyncpa [#allocation6], 0
    %14 = vsyncpa [#allocation9], 0
    %15 = vsyncpa [#allocation4], 0
    // Predicated region
    $region2: #{tpu_custom_call.1} parent=1 // pred_check
      _
    $region3: #{tpu_custom_call.1} parent=1 // pred_check_branch
      %17 = sbr.rel (0) target = $region5
    $region4: #{tpu_custom_call.1} parent=1 // pred_region
      %s19 = ssub.s32 64, 64
      %20 = vsyncadd [#allocation3], %s19
      %s22 = sshll.u32 [#allocation2], 4
      %s23 = int_to_ptr.vmem [resolvable:$true] %s22
      %25 = dma.hbm_to_vmem [thread:$0]  %s0, 64, %s23, [#allocation3]
    $region5: #{tpu_custom_call.1} parent=1 // pred_fallthru
      _
    // Predicated region
    $region6: #{tpu_custom_call.1} parent=1 // pred_check
      _
    $region7: #{tpu_custom_call.1} parent=1 // pred_check_branch
      %27 = sbr.rel (0) target = $region9
    $region8: #{tpu_custom_call.1} parent=1 // pred_region
      %s29 = ssub.s32 4096, 4096
      %30 = vsyncadd [#allocation6], %s29
      %s31 = sshll.u32 [#allocation5], 4
      %s32 = int_to_ptr.vmem [resolvable:$true] %s31
      %37 = dma.hbm_to_vmem [thread:$0]  %s1, 4096, %s32, [#allocation6], 256, 256, 16
    $region9: #{tpu_custom_call.1} parent=1 // pred_fallthru
      _
    // Predicated region
    $region10: #{tpu_custom_call.1} parent=1 // pred_check
      _
    $region11: #{tpu_custom_call.1} parent=1 // pred_check_branch
      %39 = sbr.rel (0) target = $region13
    $region12: #{tpu_custom_call.1} parent=1 // pred_region
      _
    $region13: #{tpu_custom_call.1} parent=1 // pred_fallthru
      _
    // Predicated region
    $region14: #{tpu_custom_call.1} parent=1 // pred_check
      _
    $region15: #{tpu_custom_call.1} parent=1 // pred_check_branch
      %41 = sbr.rel (0) target = $region17
    $region16: #{tpu_custom_call.1} parent=1 // pred_region
      %s43 = ssub.s32 8192, 8192
      %44 = vsyncadd [#allocation6], %s43
      %s45 = sshll.u32 [#allocation7], 4
      %s46 = int_to_ptr.vmem [resolvable:$true] %s45
      %51 = dma.hbm_to_vmem [thread:$0]  %s3, 8192, %s46, [#allocation6], 256, 256, 16
    $region17: #{tpu_custom_call.1} parent=1 // pred_fallthru
      _
    // Predicated region
    $region18: #{tpu_custom_call.1} parent=1 // pred_check
      _
    $region19: #{tpu_custom_call.1} parent=1 // pred_check_branch
      %53 = sbr.rel (0) target = $region21
    $region20: #{tpu_custom_call.1} parent=1 // pred_region
      _
    $region21: #{tpu_custom_call.1} parent=1 // pred_fallthru
      _
    // Predicated region
    $region22: #{tpu_custom_call.1} parent=1 // pred_check
      _
    $region23: #{tpu_custom_call.1} parent=1 // pred_check_branch
      %55 = sbr.rel (0) target = $region25
    $region24: #{tpu_custom_call.1} parent=1 // pred_region
      %s57 = ssub.s32 4096, 4096
      %58 = vsyncadd [#allocation9], %s57
      %s59 = sshll.u32 [#allocation8], 4
      %s60 = int_to_ptr.vmem [resolvable:$true] %s59
      %65 = dma.hbm_to_vmem [thread:$0]  %s5, 4096, %s60, [#allocation9], 128, 128, 8
    $region25: #{tpu_custom_call.1} parent=1 // pred_fallthru
      _
    // Predicated region
    $region26: #{tpu_custom_call.1} parent=1 // pred_check
      _
    $region27: #{tpu_custom_call.1} parent=1 // pred_check_branch
      %67 = sbr.rel (0) target = $region29
    $region28: #{tpu_custom_call.1} parent=1 // pred_region
      _
    $region29: #{tpu_custom_call.1} parent=1 // pred_fallthru
      _
    // Predicated region
    $region30: #{tpu_custom_call.1} parent=1 // pred_check
      _
    $region31: #{tpu_custom_call.1} parent=1 // pred_check_branch
      %69 = sbr.rel (0) target = $region33
    $region32: #{tpu_custom_call.1} parent=1 // pred_region
      %70 = dma.done [#allocation3], 64
    $region33: #{tpu_custom_call.1} parent=1 // pred_fallthru
      _
    // Predicated region
    $region34: #{tpu_custom_call.1} parent=1 // pred_check
      _
    $region35: #{tpu_custom_call.1} parent=1 // pred_check_branch
      %72 = sbr.rel (0) target = $region37
    $region36: #{tpu_custom_call.1} parent=1 // pred_region
      %73 = dma.done [#allocation6], 4096
    $region37: #{tpu_custom_call.1} parent=1 // pred_fallthru
      _
    // Predicated region
    $region38: #{tpu_custom_call.1} parent=1 // pred_check
      _
    $region39: #{tpu_custom_call.1} parent=1 // pred_check_branch
      %75 = sbr.rel (0) target = $region41
    $region40: #{tpu_custom_call.1} parent=1 // pred_region
      %76 = dma.done [#allocation6], 8192
    $region41: #{tpu_custom_call.1} parent=1 // pred_fallthru
      _
    // Predicated region
    $region42: #{tpu_custom_call.1} parent=1 // pred_check
      _
    $region43: #{tpu_custom_call.1} parent=1 // pred_check_branch
      %78 = sbr.rel (0) target = $region45
    $region44: #{tpu_custom_call.1} parent=1 // pred_region
      %79 = dma.done [#allocation9], 4096
    $region45: #{tpu_custom_call.1} parent=1 // pred_fallthru
      _
    %v80 = vld [vmem:[#allocation2] sm:$0xf]
    %v81 = vld [vmem:[#allocation5] sm:$0xff]
    %v82 = vld [vmem:[#allocation5 + $0x8] sm:$0xff]
    %v83 = vld [vmem:[#allocation5 + $0x10] sm:$0xff]
    %v84 = vld [vmem:[#allocation5 + $0x18] sm:$0xff]
    %v85 = vld [vmem:[#allocation5 + $0x20] sm:$0xff]
    %v86 = vld [vmem:[#allocation5 + $0x28] sm:$0xff]
    %v87 = vld [vmem:[#allocation5 + $0x30] sm:$0xff]
    %v88 = vld [vmem:[#allocation5 + $0x38] sm:$0xff]
    %v89 = vld [vmem:[#allocation5 + $0x40] sm:$0xff]
    %v90 = vld [vmem:[#allocation5 + $0x48] sm:$0xff]
    %v91 = vld [vmem:[#allocation5 + $0x50] sm:$0xff]
    %v92 = vld [vmem:[#allocation5 + $0x58] sm:$0xff]
    %v93 = vld [vmem:[#allocation5 + $0x60] sm:$0xff]
    %v94 = vld [vmem:[#allocation5 + $0x68] sm:$0xff]
    %v95 = vld [vmem:[#allocation5 + $0x70] sm:$0xff]
    %v96 = vld [vmem:[#allocation5 + $0x78] sm:$0xff]
    %v97 = vld [vmem:[#allocation5 + $0x80] sm:$0xff]
    %v98 = vld [vmem:[#allocation5 + $0x88] sm:$0xff]
    %v99 = vld [vmem:[#allocation5 + $0x90] sm:$0xff]
    %v100 = vld [vmem:[#allocation5 + $0x98] sm:$0xff]
    %v101 = vld [vmem:[#allocation5 + $0xa0] sm:$0xff]
    %v102 = vld [vmem:[#allocation5 + $0xa8] sm:$0xff]
    %v103 = vld [vmem:[#allocation5 + $0xb0] sm:$0xff]
    %v104 = vld [vmem:[#allocation5 + $0xb8] sm:$0xff]
    %v105 = vld [vmem:[#allocation5 + $0xc0] sm:$0xff]
    %v106 = vld [vmem:[#allocation5 + $0xc8] sm:$0xff]
    %v107 = vld [vmem:[#allocation5 + $0xd0] sm:$0xff]
    %v108 = vld [vmem:[#allocation5 + $0xd8] sm:$0xff]
    %v109 = vld [vmem:[#allocation5 + $0xe0] sm:$0xff]
    %v110 = vld [vmem:[#allocation5 + $0xe8] sm:$0xff]
    %v111 = vld [vmem:[#allocation5 + $0xf0] sm:$0xff]
    %v112 = vld [vmem:[#allocation5 + $0xf8] sm:$0xff]
    %v113 = vld [vmem:[%s2] sm:$0x3]
    %v115 = vlaneseq
    %v116 = vshrl.u32 %v115, 7
    %v117 = vsub.s32 0, %v116
    %v118 = vrot.slane %v113, %v117
    %v119 = vlaneseq
    %v120 = vshrl.u32 %v119, 7
    %v121 = vsub.s32 1, %v120
    %v122 = vrot.slane %v113, %v121
    %125 = vmatprep.subr.mxu0 %v112
    %126 = vmatpush1.msra.mxu0 %v111
    %127 = vmatprep.subr.mxu0 %v110
    %128 = vmatpush1.msra.mxu0 %v109
    %129 = vmatprep.subr.mxu0 %v108
    %130 = vmatpush1.msra.mxu0 %v107
    %131 = vmatprep.subr.mxu0 %v106
    %132 = vmatpush1.msra.mxu0 %v105
    %133 = vmatprep.subr.mxu0 %v104
    %134 = vmatpush1.msra.mxu0 %v103
    %135 = vmatprep.subr.mxu0 %v102
    %136 = vmatpush1.msra.mxu0 %v101
    %137 = vmatprep.subr.mxu0 %v100
    %138 = vmatpush1.msra.mxu0 %v99
    %139 = vmatprep.subr.mxu0 %v98
    %140 = vmatpush1.msra.mxu0 %v97
    %141 = vmatprep.subr.mxu0 %v96
    %142 = vmatpush1.msra.mxu0 %v95
    %143 = vmatprep.subr.mxu0 %v94
    %144 = vmatpush1.msra.mxu0 %v93
    %145 = vmatprep.subr.mxu0 %v92
    %146 = vmatpush1.msra.mxu0 %v91
    %147 = vmatprep.subr.mxu0 %v90
    %148 = vmatpush1.msra.mxu0 %v89
    %149 = vmatprep.subr.mxu0 %v88
    %150 = vmatpush1.msra.mxu0 %v87
    %151 = vmatprep.subr.mxu0 %v86
    %152 = vmatpush1.msra.mxu0 %v85
    %153 = vmatprep.subr.mxu0 %v84
    %154 = vmatpush1.msra.mxu0 %v83
    %155 = vmatprep.subr.mxu0 %v82
    %156 = vmatpush1.msra.mxu0 %v81
    %157 = vmatprep.subr.mxu0 0.0
    %158 = vmatpush2.msra.mxu0 0.0
    %159 = vmatprep.subr.mxu0 0.0
    %160 = vmatpush2.msra.mxu0 0.0
    %161 = vmatprep.subr.mxu0 0.0
    %162 = vmatpush2.msra.mxu0 0.0
    %163 = vmatprep.subr.mxu0 0.0
    %164 = vmatpush2.msra.mxu0 0.0
    %165 = vmatprep.subr.mxu0 0.0
    %166 = vmatpush2.msra.mxu0 0.0
    %167 = vmatprep.subr.mxu0 0.0
    %168 = vmatpush2.msra.mxu0 0.0
    %169 = vmatprep.subr.mxu0 0.0
    %170 = vmatpush2.msra.mxu0 0.0
    %171 = vmatprep.subr.mxu0 0.0
    %172 = vmatpush2.msra.mxu0 0.0
    %173 = vmatprep.subr.mxu0 0.0
    %174 = vmatpush2.msra.mxu0 0.0
    %175 = vmatprep.subr.mxu0 0.0
    %176 = vmatpush2.msra.mxu0 0.0
    %177 = vmatprep.subr.mxu0 0.0
    %178 = vmatpush2.msra.mxu0 0.0
    %179 = vmatprep.subr.mxu0 0.0
    %180 = vmatpush2.msra.mxu0 0.0
    %181 = vmatprep.subr.mxu0 0.0
    %182 = vmatpush2.msra.mxu0 0.0
    %183 = vmatprep.subr.mxu0 0.0
    %184 = vmatpush2.msra.mxu0 0.0
    %185 = vmatprep.subr.mxu0 0.0
    %186 = vmatpush2.msra.mxu0 0.0
    %187 = vmatprep.subr.mxu0 0.0
    %188 = vmatpush2.msra.mxu0 0.0
    %189 = vmatprep.mubr.f32.mxu0 0.0
    %190 = vmatmul.mubr.f32.gmra.mxu0 %v80
    %v191 = vpop.f32.mrf.mxu0
    %v192 = vadd.f32 %v118, %v191
    %v193 = vpop.f32.mrf.mxu0
    %v194 = vadd.f32 %v122, %v193
    %195 = vdwg.mxu0
    %vm196 = vcmp.gt.f32.partialorder %v192, 0.0
    %vm197 = vcmp.gt.f32.partialorder %v194, 0.0
    %v198 = vmul.f32 %v192, 0.1
    %v199 = vmul.f32 %v194, 0.1
    %v200 = vsel %vm196, %v192, %v198
    %v201 = vsel %vm197, %v194, %v199
    %v202 = vld [vmem:[#allocation7] sm:$0xff]
    %v203 = vld [vmem:[#allocation7 + $0x8] sm:$0xff]
    %v204 = vld [vmem:[#allocation7 + $0x10] sm:$0xff]
    %v205 = vld [vmem:[#allocation7 + $0x18] sm:$0xff]
    %v206 = vld [vmem:[#allocation7 + $0x20] sm:$0xff]
    %v207 = vld [vmem:[#allocation7 + $0x28] sm:$0xff]
    %v208 = vld [vmem:[#allocation7 + $0x30] sm:$0xff]
    %v209 = vld [vmem:[#allocation7 + $0x38] sm:$0xff]
    %v210 = vld [vmem:[#allocation7 + $0x40] sm:$0xff]
    %v211 = vld [vmem:[#allocation7 + $0x48] sm:$0xff]
    %v212 = vld [vmem:[#allocation7 + $0x50] sm:$0xff]
    %v213 = vld [vmem:[#allocation7 + $0x58] sm:$0xff]
    %v214 = vld [vmem:[#allocation7 + $0x60] sm:$0xff]
    %v215 = vld [vmem:[#allocation7 + $0x68] sm:$0xff]
    %v216 = vld [vmem:[#allocation7 + $0x70] sm:$0xff]
    %v217 = vld [vmem:[#allocation7 + $0x78] sm:$0xff]
    %v218 = vld [vmem:[#allocation7 + $0x80] sm:$0xff]
    %v219 = vld [vmem:[#allocation7 + $0x88] sm:$0xff]
    %v220 = vld [vmem:[#allocation7 + $0x90] sm:$0xff]
    %v221 = vld [vmem:[#allocation7 + $0x98] sm:$0xff]
    %v222 = vld [vmem:[#allocation7 + $0xa0] sm:$0xff]
    %v223 = vld [vmem:[#allocation7 + $0xa8] sm:$0xff]
    %v224 = vld [vmem:[#allocation7 + $0xb0] sm:$0xff]
    %v225 = vld [vmem:[#allocation7 + $0xb8] sm:$0xff]
    %v226 = vld [vmem:[#allocation7 + $0xc0] sm:$0xff]
    %v227 = vld [vmem:[#allocation7 + $0xc8] sm:$0xff]
    %v228 = vld [vmem:[#allocation7 + $0xd0] sm:$0xff]
    %v229 = vld [vmem:[#allocation7 + $0xd8] sm:$0xff]
    %v230 = vld [vmem:[#allocation7 + $0xe0] sm:$0xff]
    %v231 = vld [vmem:[#allocation7 + $0xe8] sm:$0xff]
    %v232 = vld [vmem:[#allocation7 + $0xf0] sm:$0xff]
    %v233 = vld [vmem:[#allocation7 + $0xf8] sm:$0xff]
    %v234 = vld [vmem:[#allocation7 + $0x100] sm:$0xff]
    %v235 = vld [vmem:[#allocation7 + $0x108] sm:$0xff]
    %v236 = vld [vmem:[#allocation7 + $0x110] sm:$0xff]
    %v237 = vld [vmem:[#allocation7 + $0x118] sm:$0xff]
    %v238 = vld [vmem:[#allocation7 + $0x120] sm:$0xff]
    %v239 = vld [vmem:[#allocation7 + $0x128] sm:$0xff]
    %v240 = vld [vmem:[#allocation7 + $0x130] sm:$0xff]
    %v241 = vld [vmem:[#allocation7 + $0x138] sm:$0xff]
    %v242 = vld [vmem:[#allocation7 + $0x140] sm:$0xff]
    %v243 = vld [vmem:[#allocation7 + $0x148] sm:$0xff]
    %v244 = vld [vmem:[#allocation7 + $0x150] sm:$0xff]
    %v245 = vld [vmem:[#allocation7 + $0x158] sm:$0xff]
    %v246 = vld [vmem:[#allocation7 + $0x160] sm:$0xff]
    %v247 = vld [vmem:[#allocation7 + $0x168] sm:$0xff]
    %v248 = vld [vmem:[#allocation7 + $0x170] sm:$0xff]
    %v249 = vld [vmem:[#allocation7 + $0x178] sm:$0xff]
    %v250 = vld [vmem:[#allocation7 + $0x180] sm:$0xff]
    %v251 = vld [vmem:[#allocation7 + $0x188] sm:$0xff]
    %v252 = vld [vmem:[#allocation7 + $0x190] sm:$0xff]
    %v253 = vld [vmem:[#allocation7 + $0x198] sm:$0xff]
    %v254 = vld [vmem:[#allocation7 + $0x1a0] sm:$0xff]
    %v255 = vld [vmem:[#allocation7 + $0x1a8] sm:$0xff]
    %v256 = vld [vmem:[#allocation7 + $0x1b0] sm:$0xff]
    %v257 = vld [vmem:[#allocation7 + $0x1b8] sm:$0xff]
    %v258 = vld [vmem:[#allocation7 + $0x1c0] sm:$0xff]
    %v259 = vld [vmem:[#allocation7 + $0x1c8] sm:$0xff]
    %v260 = vld [vmem:[#allocation7 + $0x1d0] sm:$0xff]
    %v261 = vld [vmem:[#allocation7 + $0x1d8] sm:$0xff]
    %v262 = vld [vmem:[#allocation7 + $0x1e0] sm:$0xff]
    %v263 = vld [vmem:[#allocation7 + $0x1e8] sm:$0xff]
    %v264 = vld [vmem:[#allocation7 + $0x1f0] sm:$0xff]
    %v265 = vld [vmem:[#allocation7 + $0x1f8] sm:$0xff]
    %v266 = vld [vmem:[%s4] sm:$0x3]
    %v268 = vlaneseq
    %v269 = vshrl.u32 %v268, 7
    %v270 = vsub.s32 0, %v269
    %v271 = vrot.slane %v266, %v270
    %v272 = vlaneseq
    %v273 = vshrl.u32 %v272, 7
    %v274 = vsub.s32 1, %v273
    %v275 = vrot.slane %v266, %v274
    %278 = vmatprep.subr.mxu0 %v233
    %279 = vmatpush1.msra.mxu0 %v232
    %280 = vmatprep.subr.mxu0 %v231
    %281 = vmatpush1.msra.mxu0 %v230
    %282 = vmatprep.subr.mxu0 %v229
    %283 = vmatpush1.msra.mxu0 %v228
    %284 = vmatprep.subr.mxu0 %v227
    %285 = vmatpush1.msra.mxu0 %v226
    %286 = vmatprep.subr.mxu0 %v225
    %287 = vmatpush1.msra.mxu0 %v224
    %288 = vmatprep.subr.mxu0 %v223
    %289 = vmatpush1.msra.mxu0 %v222
    %290 = vmatprep.subr.mxu0 %v221
    %291 = vmatpush1.msra.mxu0 %v220
    %292 = vmatprep.subr.mxu0 %v219
    %293 = vmatpush1.msra.mxu0 %v218
    %294 = vmatprep.subr.mxu0 %v217
    %295 = vmatpush1.msra.mxu0 %v216
    %296 = vmatprep.subr.mxu0 %v215
    %297 = vmatpush1.msra.mxu0 %v214
    %298 = vmatprep.subr.mxu0 %v213
    %299 = vmatpush1.msra.mxu0 %v212
    %300 = vmatprep.subr.mxu0 %v211
    %301 = vmatpush1.msra.mxu0 %v210
    %302 = vmatprep.subr.mxu0 %v209
    %303 = vmatpush1.msra.mxu0 %v208
    %304 = vmatprep.subr.mxu0 %v207
    %305 = vmatpush1.msra.mxu0 %v206
    %306 = vmatprep.subr.mxu0 %v205
    %307 = vmatpush1.msra.mxu0 %v204
    %308 = vmatprep.subr.mxu0 %v203
    %309 = vmatpush1.msra.mxu0 %v202
    %310 = vmatprep.subr.mxu0 %v265
    %311 = vmatpush2.msra.mxu0 %v264
    %312 = vmatprep.subr.mxu0 %v263
    %313 = vmatpush2.msra.mxu0 %v262
    %314 = vmatprep.subr.mxu0 %v261
    %315 = vmatpush2.msra.mxu0 %v260
    %316 = vmatprep.subr.mxu0 %v259
    %317 = vmatpush2.msra.mxu0 %v258
    %318 = vmatprep.subr.mxu0 %v257
    %319 = vmatpush2.msra.mxu0 %v256
    %320 = vmatprep.subr.mxu0 %v255
    %321 = vmatpush2.msra.mxu0 %v254
    %322 = vmatprep.subr.mxu0 %v253
    %323 = vmatpush2.msra.mxu0 %v252
    %324 = vmatprep.subr.mxu0 %v251
    %325 = vmatpush2.msra.mxu0 %v250
    %326 = vmatprep.subr.mxu0 %v249
    %327 = vmatpush2.msra.mxu0 %v248
    %328 = vmatprep.subr.mxu0 %v247
    %329 = vmatpush2.msra.mxu0 %v246
    %330 = vmatprep.subr.mxu0 %v245
    %331 = vmatpush2.msra.mxu0 %v244
    %332 = vmatprep.subr.mxu0 %v243
    %333 = vmatpush2.msra.mxu0 %v242
    %334 = vmatprep.subr.mxu0 %v241
    %335 = vmatpush2.msra.mxu0 %v240
    %336 = vmatprep.subr.mxu0 %v239
    %337 = vmatpush2.msra.mxu0 %v238
    %338 = vmatprep.subr.mxu0 %v237
    %339 = vmatpush2.msra.mxu0 %v236
    %340 = vmatprep.subr.mxu0 %v235
    %341 = vmatpush2.msra.mxu0 %v234
    %342 = vmatprep.mubr.f32.mxu0 %v201
    %343 = vmatmul.mubr.f32.gmra.mxu0 %v200
    %v344 = vpop.f32.mrf.mxu0
    %v345 = vadd.f32 %v271, %v344
    %v346 = vpop.f32.mrf.mxu0
    %v347 = vadd.f32 %v275, %v346
    %348 = vdwg.mxu0
    %vm349 = vcmp.gt.f32.partialorder %v345, 0.0
    %vm350 = vcmp.gt.f32.partialorder %v347, 0.0
    %v351 = vmul.f32 %v345, 0.1
    %v352 = vmul.f32 %v347, 0.1
    %v353 = vsel %vm349, %v345, %v351
    %v354 = vsel %vm350, %v347, %v352
    %v355 = vld [vmem:[#allocation8] sm:$0xff]
    %v356 = vld [vmem:[#allocation8 + $0x8] sm:$0xff]
    %v357 = vld [vmem:[#allocation8 + $0x10] sm:$0xff]
    %v358 = vld [vmem:[#allocation8 + $0x18] sm:$0xff]
    %v359 = vld [vmem:[#allocation8 + $0x20] sm:$0xff]
    %v360 = vld [vmem:[#allocation8 + $0x28] sm:$0xff]
    %v361 = vld [vmem:[#allocation8 + $0x30] sm:$0xff]
    %v362 = vld [vmem:[#allocation8 + $0x38] sm:$0xff]
    %v363 = vld [vmem:[#allocation8 + $0x40] sm:$0xff]
    %v364 = vld [vmem:[#allocation8 + $0x48] sm:$0xff]
    %v365 = vld [vmem:[#allocation8 + $0x50] sm:$0xff]
    %v366 = vld [vmem:[#allocation8 + $0x58] sm:$0xff]
    %v367 = vld [vmem:[#allocation8 + $0x60] sm:$0xff]
    %v368 = vld [vmem:[#allocation8 + $0x68] sm:$0xff]
    %v369 = vld [vmem:[#allocation8 + $0x70] sm:$0xff]
    %v370 = vld [vmem:[#allocation8 + $0x78] sm:$0xff]
    %v371 = vld [vmem:[#allocation8 + $0x80] sm:$0xff]
    %v372 = vld [vmem:[#allocation8 + $0x88] sm:$0xff]
    %v373 = vld [vmem:[#allocation8 + $0x90] sm:$0xff]
    %v374 = vld [vmem:[#allocation8 + $0x98] sm:$0xff]
    %v375 = vld [vmem:[#allocation8 + $0xa0] sm:$0xff]
    %v376 = vld [vmem:[#allocation8 + $0xa8] sm:$0xff]
    %v377 = vld [vmem:[#allocation8 + $0xb0] sm:$0xff]
    %v378 = vld [vmem:[#allocation8 + $0xb8] sm:$0xff]
    %v379 = vld [vmem:[#allocation8 + $0xc0] sm:$0xff]
    %v380 = vld [vmem:[#allocation8 + $0xc8] sm:$0xff]
    %v381 = vld [vmem:[#allocation8 + $0xd0] sm:$0xff]
    %v382 = vld [vmem:[#allocation8 + $0xd8] sm:$0xff]
    %v383 = vld [vmem:[#allocation8 + $0xe0] sm:$0xff]
    %v384 = vld [vmem:[#allocation8 + $0xe8] sm:$0xff]
    %v385 = vld [vmem:[#allocation8 + $0xf0] sm:$0xff]
    %v386 = vld [vmem:[#allocation8 + $0xf8] sm:$0xff]
    %v387 = vld [vmem:[%s6] sm:$0x1]
    %v389 = vlaneseq
    %v390 = vshrl.u32 %v389, 7
    %v391 = vsub.s32 0, %v390
    %v392 = vrot.slane %v387, %v391
    %394 = vmatprep.subr.mxu0 0.0
    %395 = vmatpush1.msra.mxu0 %v370
    %396 = vmatprep.subr.mxu0 0.0
    %397 = vmatpush1.msra.mxu0 %v369
    %398 = vmatprep.subr.mxu0 0.0
    %399 = vmatpush1.msra.mxu0 %v368
    %400 = vmatprep.subr.mxu0 0.0
    %401 = vmatpush1.msra.mxu0 %v367
    %402 = vmatprep.subr.mxu0 0.0
    %403 = vmatpush1.msra.mxu0 %v366
    %404 = vmatprep.subr.mxu0 0.0
    %405 = vmatpush1.msra.mxu0 %v365
    %406 = vmatprep.subr.mxu0 0.0
    %407 = vmatpush1.msra.mxu0 %v364
    %408 = vmatprep.subr.mxu0 0.0
    %409 = vmatpush1.msra.mxu0 %v363
    %410 = vmatprep.subr.mxu0 0.0
    %411 = vmatpush1.msra.mxu0 %v362
    %412 = vmatprep.subr.mxu0 0.0
    %413 = vmatpush1.msra.mxu0 %v361
    %414 = vmatprep.subr.mxu0 0.0
    %415 = vmatpush1.msra.mxu0 %v360
    %416 = vmatprep.subr.mxu0 0.0
    %417 = vmatpush1.msra.mxu0 %v359
    %418 = vmatprep.subr.mxu0 0.0
    %419 = vmatpush1.msra.mxu0 %v358
    %420 = vmatprep.subr.mxu0 0.0
    %421 = vmatpush1.msra.mxu0 %v357
    %422 = vmatprep.subr.mxu0 0.0
    %423 = vmatpush1.msra.mxu0 %v356
    %424 = vmatprep.subr.mxu0 0.0
    %425 = vmatpush1.msra.mxu0 %v355
    %426 = vmatprep.subr.mxu0 0.0
    %427 = vmatpush2.msra.mxu0 %v386
    %428 = vmatprep.subr.mxu0 0.0
    %429 = vmatpush2.msra.mxu0 %v385
    %430 = vmatprep.subr.mxu0 0.0
    %431 = vmatpush2.msra.mxu0 %v384
    %432 = vmatprep.subr.mxu0 0.0
    %433 = vmatpush2.msra.mxu0 %v383
    %434 = vmatprep.subr.mxu0 0.0
    %435 = vmatpush2.msra.mxu0 %v382
    %436 = vmatprep.subr.mxu0 0.0
    %437 = vmatpush2.msra.mxu0 %v381
    %438 = vmatprep.subr.mxu0 0.0
    %439 = vmatpush2.msra.mxu0 %v380
    %440 = vmatprep.subr.mxu0 0.0
    %441 = vmatpush2.msra.mxu0 %v379
    %442 = vmatprep.subr.mxu0 0.0
    %443 = vmatpush2.msra.mxu0 %v378
    %444 = vmatprep.subr.mxu0 0.0
    %445 = vmatpush2.msra.mxu0 %v377
    %446 = vmatprep.subr.mxu0 0.0
    %447 = vmatpush2.msra.mxu0 %v376
    %448 = vmatprep.subr.mxu0 0.0
    %449 = vmatpush2.msra.mxu0 %v375
    %450 = vmatprep.subr.mxu0 0.0
    %451 = vmatpush2.msra.mxu0 %v374
    %452 = vmatprep.subr.mxu0 0.0
    %453 = vmatpush2.msra.mxu0 %v373
    %454 = vmatprep.subr.mxu0 0.0
    %455 = vmatpush2.msra.mxu0 %v372
    %456 = vmatprep.subr.mxu0 0.0
    %457 = vmatpush2.msra.mxu0 %v371
    %458 = vmatprep.mubr.f32.mxu0 %v354
    %459 = vmatmul.mubr.f32.gmra.mxu0 %v353
    %v460 = vpop.f32.mrf.mxu0
    %v461 = vadd.f32 %v392, %v460
    %v462 = vpop.f32.mrf.mxu0
    %463 = vdwg.mxu0
    %464 = vst [vmem:[#allocation10] sm:$0xf] %v461
    // Predicated region
    $region46: #{tpu_custom_call.1} parent=1 // pred_check
      _
    $region47: #{tpu_custom_call.1} parent=1 // pred_check_branch
      %466 = sbr.rel (0) target = $region49
    $region48: #{tpu_custom_call.1} parent=1 // pred_region
      %s468 = ssub.s32 64, 64
      %469 = vsyncadd [#allocation4], %s468
      %s471 = sshll.u32 [#allocation10], 4
      %s472 = int_to_ptr.vmem [resolvable:$true] %s471
      %474 = dma.vmem_to_hbm [thread:$0]  %s472, 64, %s7, [#allocation4]
    $region49: #{tpu_custom_call.1} parent=1 // pred_fallthru
      _
    // Predicated region
    $region50: #{tpu_custom_call.1} parent=1 // pred_check
      _
    $region51: #{tpu_custom_call.1} parent=1 // pred_check_branch
      %476 = sbr.rel (0) target = $region53
    $region52: #{tpu_custom_call.1} parent=1 // pred_region
      %477 = dma.done [#allocation4], 64
    $region53: #{tpu_custom_call.1} parent=1 // pred_fallthru
      _
    %478 = vsyncpa [#allocation3], 1
    %479 = vsyncpa [#allocation6], 1
    %480 = vsyncpa [#allocation9], 1
    %481 = vsyncpa [#allocation4], 1

</llo_original>
